<compile_context>
chip_gen: v6e
topology: v6e:2x2x1
jax: 0.10.0
libtpu: 0.0.40
codegen_flags: <defaults>
</compile_context>

<pallas_src>
import functools
import math

import jax
import jax.numpy as jnp
from jax.experimental import pallas as pl
from jax.experimental.pallas import tpu as pltpu


def _tile(dim, pref):
    """Tile size: `pref` if it evenly divides `dim`, else the full dim
    (full-extent blocks are always legal w.r.t. the (8,128) constraint)."""
    return pref if (dim >= pref and dim % pref == 0) else dim


# ----------------------------- dense (tiled matmul + bias [+ GELU]) -----------------------------

def _dense_kernel(x_ref, w_ref, b_ref, o_ref, acc_ref, *, activation):
    @pl.when(pl.program_id(2) == 0)
    def _():
        acc_ref[...] = jnp.zeros_like(acc_ref)

    acc_ref[...] += jnp.dot(x_ref[...], w_ref[...],
                            preferred_element_type=jnp.float32)

    @pl.when(pl.program_id(2) == pl.num_programs(2) - 1)
    def _():
        y = acc_ref[...] + b_ref[...]
        if activation == "gelu":
            # exact (erf-based) GELU, as in HF BERT's default "gelu"
            y = 0.5 * y * (1.0 + jax.lax.erf(y * jnp.float32(0.7071067811865476)))
        o_ref[...] = y.astype(o_ref.dtype)


def pallas_dense(x, w, b, activation=None, *, tm=256, tn=256, tk=512):
    """x: [M, K], w: [K, N], b: [N] -> [M, N] float32."""
    M, K = x.shape
    N = w.shape[1]
    tm, tn, tk = _tile(M, tm), _tile(N, tn), _tile(K, tk)
    b2 = b.reshape(1, N)
    kernel = functools.partial(_dense_kernel, activation=activation)
    return pl.pallas_call(
        kernel,
        out_shape=jax.ShapeDtypeStruct((M, N), jnp.float32),
        grid=(M // tm, N // tn, K // tk),
        in_specs=[
            pl.BlockSpec((tm, tk), lambda i, j, k: (i, k)),
            pl.BlockSpec((tk, tn), lambda i, j, k: (k, j)),
            pl.BlockSpec((1, tn), lambda i, j, k: (0, j)),
        ],
        out_specs=pl.BlockSpec((tm, tn), lambda i, j, k: (i, j)),
        scratch_shapes=[pltpu.VMEM((tm, tn), jnp.float32)],
        compiler_params=pltpu.CompilerParams(
            dimension_semantics=("parallel", "parallel", "arbitrary")),
    )(x, w, b2)


# ----------------------------- LayerNorm (row-tiled, optional fused residual) ------------------

def _ln_math(x, g, b, eps):
    mean = jnp.mean(x, axis=-1, keepdims=True)
    var = jnp.mean(jnp.square(x - mean), axis=-1, keepdims=True)
    return (x - mean) * jax.lax.rsqrt(var + eps) * g + b


def _layernorm_kernel(x_ref, g_ref, b_ref, o_ref, *, eps):
    o_ref[...] = _ln_math(x_ref[...], g_ref[...], b_ref[...], eps)


def _residual_layernorm_kernel(x_ref, r_ref, g_ref, b_ref, o_ref, *, eps):
    o_ref[...] = _ln_math(x_ref[...] + r_ref[...], g_ref[...], b_ref[...], eps)


def pallas_layernorm(x, gamma, beta, eps=1e-12, residual=None, *, tm=512):
    """x (and optional residual): [M, H] -> [M, H], LN over last dim of (x+residual)."""
    M, H = x.shape
    tm = _tile(M, tm)
    g2 = gamma.reshape(1, H)
    b2 = beta.reshape(1, H)
    row_spec = pl.BlockSpec((tm, H), lambda i: (i, 0))
    vec_spec = pl.BlockSpec((1, H), lambda i: (0, 0))
    if residual is None:
        kernel = functools.partial(_layernorm_kernel, eps=eps)
        in_specs = [row_spec, vec_spec, vec_spec]
        args = (x, g2, b2)
    else:
        kernel = functools.partial(_residual_layernorm_kernel, eps=eps)
        in_specs = [row_spec, row_spec, vec_spec, vec_spec]
        args = (x, residual, g2, b2)
    return pl.pallas_call(
        kernel,
        out_shape=jax.ShapeDtypeStruct((M, H), jnp.float32),
        grid=(M // tm,),
        in_specs=in_specs,
        out_specs=row_spec,
        compiler_params=pltpu.CompilerParams(dimension_semantics=("parallel",)),
    )(*args)


# ----------------------------- flash-style attention (online softmax) --------------------------

def _flash_attn_kernel(q_ref, k_ref, v_ref, mask_ref, o_ref,
                       m_sc, l_sc, acc_sc, *, scale):
    ki = pl.program_id(3)

    @pl.when(ki == 0)
    def _():
        m_sc[...] = jnp.full_like(m_sc, -jnp.inf)
        l_sc[...] = jnp.zeros_like(l_sc)
        acc_sc[...] = jnp.zeros_like(acc_sc)

    q = q_ref[...][0, 0] * jnp.float32(scale)      # [tq, dH]  (scale folded into q)
    k = k_ref[...][0, 0]                           # [tkv, dH]
    v = v_ref[...][0, 0]                           # [tkv, dH]

    # scores: contract head dims, no explicit transpose
    s = jax.lax.dot_general(q, k, (((1,), (1,)), ((), ())),
                            preferred_element_type=jnp.float32)   # [tq, tkv]
    s = s + mask_ref[...][0]                       # additive key mask, [1, tkv]

    m_new = jnp.maximum(m_sc[...], jnp.max(s, axis=-1, keepdims=True))
    alpha = jnp.exp(m_sc[...] - m_new)
    p = jnp.exp(s - m_new)
    l_sc[...] = alpha * l_sc[...] + jnp.sum(p, axis=-1, keepdims=True)
    acc_sc[...] = alpha * acc_sc[...] + jnp.dot(p, v,
                                                preferred_element_type=jnp.float32)
    m_sc[...] = m_new

    @pl.when(ki == pl.num_programs(3) - 1)
    def _():
        inv_l = pl.reciprocal(l_sc[...], approx=True)
        o_ref[...] = (acc_sc[...] * inv_l)[None, None].astype(o_ref.dtype)


def pallas_flash_attention(q, k, v, add_mask, *, tq=256, tkv=256):
    """q,k,v: [B, nH, S, dH]; add_mask: [B, 1, S] additive (0 / -10000) -> [B, nH, S, dH]."""
    B, nH, S, dH = q.shape
    tq, tkv = _tile(S, tq), _tile(S, tkv)
    kernel = functools.partial(_flash_attn_kernel, scale=1.0 / math.sqrt(dH))
    return pl.pallas_call(
        kernel,
        out_shape=jax.ShapeDtypeStruct((B, nH, S, dH), jnp.float32),
        grid=(B, nH, S // tq, S // tkv),
        in_specs=[
            pl.BlockSpec((1, 1, tq, dH), lambda b, h, qi, ki: (b, h, qi, 0)),
            pl.BlockSpec((1, 1, tkv, dH), lambda b, h, qi, ki: (b, h, ki, 0)),
            pl.BlockSpec((1, 1, tkv, dH), lambda b, h, qi, ki: (b, h, ki, 0)),
            pl.BlockSpec((1, 1, tkv), lambda b, h, qi, ki: (b, 0, ki)),
        ],
        out_specs=pl.BlockSpec((1, 1, tq, dH), lambda b, h, qi, ki: (b, h, qi, 0)),
        scratch_shapes=[
            pltpu.VMEM((tq, 1), jnp.float32),    # running max
            pltpu.VMEM((tq, 1), jnp.float32),    # running sum
            pltpu.VMEM((tq, dH), jnp.float32),   # running output
        ],
        compiler_params=pltpu.CompilerParams(
            dimension_semantics=("parallel", "parallel", "parallel", "arbitrary")),
    )(q, k, v, add_mask)


# ----------------------------- Model (glue) -----------------------------

class Config:
    vocab_size = 100
    hidden_size = 32
    num_heads = 4
    num_layers = 2
    intermediate_size = 64
    max_position_embeddings = 32
    type_vocab_size = 2
    layer_norm_eps = 1e-12


def init_params(cfg, key):
    def nrm(key, shape, std=0.02):
        return jax.random.normal(key, shape, dtype=jnp.float32) * std

    keys = iter(jax.random.split(key, 128))
    p = {}
    p["word_emb"] = nrm(next(keys), (cfg.vocab_size, cfg.hidden_size))
    p["pos_emb"] = nrm(next(keys), (cfg.max_position_embeddings, cfg.hidden_size))
    p["type_emb"] = nrm(next(keys), (cfg.type_vocab_size, cfg.hidden_size))
    p["emb_ln_g"] = jnp.ones((cfg.hidden_size,), jnp.float32)
    p["emb_ln_b"] = jnp.zeros((cfg.hidden_size,), jnp.float32)

    p["layers"] = []
    H, I = cfg.hidden_size, cfg.intermediate_size
    for _ in range(cfg.num_layers):
        q_w, k_w, v_w = nrm(next(keys), (H, H)), nrm(next(keys), (H, H)), nrm(next(keys), (H, H))
        lp = {
            # fused QKV projection: read x once, one matmul
            "qkv_w": jnp.concatenate([q_w, k_w, v_w], axis=1),       # [H, 3H]
            "qkv_b": jnp.zeros((3 * H,), jnp.float32),
            "o_w": nrm(next(keys), (H, H)), "o_b": jnp.zeros((H,), jnp.float32),
            "attn_ln_g": jnp.ones((H,), jnp.float32),
            "attn_ln_b": jnp.zeros((H,), jnp.float32),
            "ffn_w1": nrm(next(keys), (H, I)), "ffn_b1": jnp.zeros((I,), jnp.float32),
            "ffn_w2": nrm(next(keys), (I, H)), "ffn_b2": jnp.zeros((H,), jnp.float32),
            "ffn_ln_g": jnp.ones((H,), jnp.float32),
            "ffn_ln_b": jnp.zeros((H,), jnp.float32),
        }
        p["layers"].append(lp)

    # qa_outputs: Linear(hidden_size, 2)
    p["qa_w"] = nrm(next(keys), (cfg.hidden_size, 2))
    p["qa_b"] = jnp.zeros((2,), jnp.float32)
    return p


def bert_mrc_forward(params, cfg, input_ids, token_type_ids, attention_mask):
    """Equivalent of BERTPretrainedMRC.forward (BertForQuestionAnswering)."""
    B, S = input_ids.shape
    H = cfg.hidden_size
    nH = cfg.num_heads
    dH = H // nH

    # --- embeddings (gathers are glue; LayerNorm is a Pallas kernel) ---
    positions = jnp.arange(S, dtype=jnp.int32)
    emb = (params["word_emb"][input_ids]
           + params["pos_emb"][positions][None, :, :]
           + params["type_emb"][token_type_ids])
    x = pallas_layernorm(emb.reshape(B * S, H),
                         params["emb_ln_g"], params["emb_ln_b"],
                         eps=cfg.layer_norm_eps)

    # compact additive key mask [B, 1, S]; broadcast over heads/queries in-kernel
    add_mask = ((1.0 - attention_mask.astype(jnp.float32)) * -10000.0)[:, None, :]

    for lp in params["layers"]:
        # --- self-attention (fused QKV projection) ---
        qkv = pallas_dense(x, lp["qkv_w"], lp["qkv_b"])          # [B*S, 3H]
        qkv = qkv.reshape(B, S, 3, nH, dH)
        q = qkv[:, :, 0].transpose(0, 2, 1, 3)                   # [B, nH, S, dH]
        k = qkv[:, :, 1].transpose(0, 2, 1, 3)
        v = qkv[:, :, 2].transpose(0, 2, 1, 3)
        ctx = pallas_flash_attention(q, k, v, add_mask)          # [B, nH, S, dH]
        ctx = ctx.transpose(0, 2, 1, 3).reshape(B * S, H)
        attn_out = pallas_dense(ctx, lp["o_w"], lp["o_b"])
        # residual add fused into LayerNorm
        x = pallas_layernorm(attn_out, lp["attn_ln_g"], lp["attn_ln_b"],
                             eps=cfg.layer_norm_eps, residual=x)

        # --- feed-forward ---
        h = pallas_dense(x, lp["ffn_w1"], lp["ffn_b1"], activation="gelu")
        ffn_out = pallas_dense(h, lp["ffn_w2"], lp["ffn_b2"])
        x = pallas_layernorm(ffn_out, lp["ffn_ln_g"], lp["ffn_ln_b"],
                             eps=cfg.layer_norm_eps, residual=x)

    # --- qa_outputs head: N=2 is too narrow for lane-dense stores;
    #     pad to a 128-wide output tile and slice outside the kernel. ---
    qa_w_pad = jnp.zeros((H, 128), jnp.float32).at[:, :2].set(params["qa_w"])
    qa_b_pad = jnp.zeros((128,), jnp.float32).at[:2].set(params["qa_b"])
    logits = pallas_dense(x, qa_w_pad, qa_b_pad)[:, :2].reshape(B, S, 2)
    start_logits = logits[..., 0]   # [B, S]
    end_logits = logits[..., 1]     # [B, S]
    return start_logits, end_logits, None


# ----------------------------- main -----------------------------

if __name__ == "__main__":
    cfg = Config()
    key = jax.random.PRNGKey(0)
    k_param, k_ids = jax.random.split(key)

    params = init_params(cfg, k_param)

    B, S = 2, 8
    input_ids = jax.random.randint(k_ids, (B, S), 0, cfg.vocab_size,
                                   dtype=jnp.int32)
    # first half query (type 0), second half context (type 1)
    token_type_ids = jnp.concatenate(
        [jnp.zeros((B, S // 2), jnp.int32), jnp.ones((B, S // 2), jnp.int32)],
        axis=1)
    # last token of second example is padding
    attention_mask = jnp.ones((B, S), jnp.int32).at[1, -1].set(0)

    start_logits, end_logits, match_logits = bert_mrc_forward(
        params, cfg, input_ids, token_type_ids, attention_mask)

    jax.block_until_ready(start_logits)
    jax.block_until_ready(end_logits)
    assert start_logits.shape == (B, S) and end_logits.shape == (B, S)
    assert match_logits is None
    assert bool(jnp.all(jnp.isfinite(start_logits))) and bool(jnp.all(jnp.isfinite(end_logits)))
    print("KERNEL_OK")
</pallas_src>

<mosaic_0001>
module attributes {stable_mosaic.version = 11 : i64} {
  func.func @_layernorm_kernel(%arg0: i32, %arg1: memref<16x32xf32, #tpu.memory_space<vmem>>, %arg2: memref<1x32xf32, #tpu.memory_space<vmem>>, %arg3: memref<1x32xf32, #tpu.memory_space<vmem>>, %arg4: memref<16x32xf32, #tpu.memory_space<vmem>>) attributes {dimension_semantics = [#tpu.dimension_semantics<parallel>], iteration_bounds = array<i64: 1>, scalar_prefetch = 0 : i64, scratch_operands = 0 : i64, tpu.core_type = #tpu.core_type<tc>, window_params = [{transform_indices = @transform_0, window_bounds = array<i64: 16, 32>}, {pipeline_mode = #tpu.pipeline_mode<synchronous>, transform_indices = @transform_1, window_bounds = array<i64: 1, 32>}, {pipeline_mode = #tpu.pipeline_mode<synchronous>, transform_indices = @transform_2, window_bounds = array<i64: 1, 32>}, {transform_indices = @transform_3, window_bounds = array<i64: 16, 32>}]} {
    %c0 = arith.constant 0 : index
    %c0_0 = arith.constant 0 : index
    %0 = vector.load %arg1[%c0, %c0_0] : memref<16x32xf32, #tpu.memory_space<vmem>>, vector<16x32xf32>
    %c0_1 = arith.constant 0 : index
    %c0_2 = arith.constant 0 : index
    %1 = vector.load %arg2[%c0_1, %c0_2] : memref<1x32xf32, #tpu.memory_space<vmem>>, vector<1x32xf32>
    %c0_3 = arith.constant 0 : index
    %c0_4 = arith.constant 0 : index
    %2 = vector.load %arg3[%c0_3, %c0_4] : memref<1x32xf32, #tpu.memory_space<vmem>>, vector<1x32xf32>
    %cst = arith.constant dense<0.000000e+00> : vector<16xf32>
    %3 = vector.multi_reduction <add>, %0, %cst [1] : vector<16x32xf32> to vector<16xf32>
    %4 = vector.shape_cast %3 : vector<16xf32> to vector<16x1xf32>
    %cst_5 = arith.constant 3.200000e+01 : f32
    %5 = vector.broadcast %cst_5 : f32 to vector<16x1xf32>
    %6 = arith.divf %4, %5 : vector<16x1xf32>
    %7 = vector.broadcast %6 : vector<16x1xf32> to vector<16x32xf32>
    %8 = arith.subf %0, %7 : vector<16x32xf32>
    %9 = arith.mulf %8, %8 : vector<16x32xf32>
    %cst_6 = arith.constant dense<0.000000e+00> : vector<16xf32>
    %10 = vector.multi_reduction <add>, %9, %cst_6 [1] : vector<16x32xf32> to vector<16xf32>
    %11 = vector.shape_cast %10 : vector<16xf32> to vector<16x1xf32>
    %cst_7 = arith.constant 3.200000e+01 : f32
    %12 = vector.broadcast %cst_7 : f32 to vector<16x1xf32>
    %13 = arith.divf %11, %12 : vector<16x1xf32>
    %14 = vector.broadcast %6 : vector<16x1xf32> to vector<16x32xf32>
    %15 = arith.subf %0, %14 : vector<16x32xf32>
    %cst_8 = arith.constant 9.99999996E-13 : f32
    %16 = vector.broadcast %cst_8 : f32 to vector<16x1xf32>
    %17 = arith.addf %13, %16 : vector<16x1xf32>
    %18 = math.rsqrt %17 : vector<16x1xf32>
    %19 = vector.broadcast %18 : vector<16x1xf32> to vector<16x32xf32>
    %20 = arith.mulf %15, %19 : vector<16x32xf32>
    %21 = vector.broadcast %1 : vector<1x32xf32> to vector<16x32xf32>
    %22 = arith.mulf %20, %21 : vector<16x32xf32>
    %23 = vector.broadcast %2 : vector<1x32xf32> to vector<16x32xf32>
    %24 = arith.addf %22, %23 : vector<16x32xf32>
    %c0_9 = arith.constant 0 : index
    %c0_10 = arith.constant 0 : index
    %25 = vector.load %arg4[%c0_9, %c0_10] : memref<16x32xf32, #tpu.memory_space<vmem>>, vector<16x32xf32>
    tpu.vector_store %arg4[%c0_9, %c0_10], %24 {strides = array<i32>} : memref<16x32xf32, #tpu.memory_space<vmem>>, vector<16x32xf32>,
    return
  }
  func.func @transform_0(%arg0: i32) -> (i32, i32) {
    %c0_i32 = arith.constant 0 : i32
    %c0_i32_0 = arith.constant 0 : i32
    return %arg0, %c0_i32 : i32, i32
  }
  func.func @transform_1(%arg0: i32) -> (i32, i32) {
    %c0_i32 = arith.constant 0 : i32
    %c0_i32_0 = arith.constant 0 : i32
    %c0_i32_1 = arith.constant 0 : i32
    return %c0_i32, %c0_i32_0 : i32, i32
  }
  func.func @transform_2(%arg0: i32) -> (i32, i32) {
    %c0_i32 = arith.constant 0 : i32
    %c0_i32_0 = arith.constant 0 : i32
    %c0_i32_1 = arith.constant 0 : i32
    return %c0_i32, %c0_i32_0 : i32, i32
  }
  func.func @transform_3(%arg0: i32) -> (i32, i32) {
    %c0_i32 = arith.constant 0 : i32
    %c0_i32_0 = arith.constant 0 : i32
    return %arg0, %c0_i32 : i32, i32
  }
}

</mosaic_0001>

<llo_original>
// kernel: tpu_custom_call.1
$region0: #{tpu_custom_call.1}
  #allocation0 [shape = 'u32[]', space=smem, size = 0x4, offset = 0x4, fixed_abs, tag = 'smem constant byte address 0x4 - core index']
  #allocation1 [shape = 'u32[144,128]{1,0:T(1,128)}', space=vmem, size = 0x12000, scoped, tag = 'internal scratch']
  %s0 = inlined_call_operand.hbm [shape: f32[16,32], index: 0, kind: input, shape index: {}]
  %s1 = inlined_call_operand.vmem [shape: f32[1,32], index: 1, kind: input, shape index: {}]
  %s2 = inlined_call_operand.vmem [shape: f32[1,32], index: 2, kind: input, shape index: {}]
  %s3 = inlined_call_operand.hbm [shape: f32[16,32], index: 3, kind: output, shape index: {}]
  %s4 = sld [smem:[#allocation0]]
  $region26: #{tpu_custom_call.1} parent=0
    _
  %s6 = ssub.s32 1, %s4
  %s7 = scalar_select 0, %s6, %s4
  $region1: #{tpu_custom_call.1} parent=0
    #allocation2 [shape = 'u8[8192]{0}', space=vmem, size = 0x2000, scoped, tag = 'input window, operand 0, single buffered']
    #allocation3 [shape = 's32[1]{0}', space=sflag, size = 0x4, scoped, tag = 'scoped memory for tpu_custom_call.1']
    #allocation4 [shape = 's32[1]{0}', space=sflag, size = 0x4, scoped, tag = 'scoped memory for tpu_custom_call.1']
    #allocation5 [shape = 'u8[8192]{0}', space=vmem, size = 0x2000, scoped, tag = 'output window, operand 0, single buffered']
    %8 = vsyncpa [#allocation3], 0
    %9 = vsyncpa [#allocation4], 0
    // Predicated region
    $region2: #{tpu_custom_call.1} parent=1 // pred_check
      _
    $region3: #{tpu_custom_call.1} parent=1 // pred_check_branch
      %11 = sbr.rel (0) target = $region5
    $region4: #{tpu_custom_call.1} parent=1 // pred_region
      %s13 = ssub.s32 256, 256
      %14 = vsyncadd [#allocation3], %s13
      %s15 = sshll.u32 [#allocation2], 4
      %s16 = int_to_ptr.vmem [resolvable:$true] %s15
      %21 = dma.hbm_to_vmem [thread:$0]  %s0, 256, %s16, [#allocation3], 128, 128, 8
    $region5: #{tpu_custom_call.1} parent=1 // pred_fallthru
      _
    // Predicated region
    $region6: #{tpu_custom_call.1} parent=1 // pred_check
      _
    $region7: #{tpu_custom_call.1} parent=1 // pred_check_branch
      %23 = sbr.rel (0) target = $region9
    $region8: #{tpu_custom_call.1} parent=1 // pred_region
      _
    $region9: #{tpu_custom_call.1} parent=1 // pred_fallthru
      _
    // Predicated region
    $region10: #{tpu_custom_call.1} parent=1 // pred_check
      _
    $region11: #{tpu_custom_call.1} parent=1 // pred_check_branch
      %25 = sbr.rel (0) target = $region13
    $region12: #{tpu_custom_call.1} parent=1 // pred_region
      _
    $region13: #{tpu_custom_call.1} parent=1 // pred_fallthru
      _
    // Predicated region
    $region14: #{tpu_custom_call.1} parent=1 // pred_check
      _
    $region15: #{tpu_custom_call.1} parent=1 // pred_check_branch
      %27 = sbr.rel (0) target = $region17
    $region16: #{tpu_custom_call.1} parent=1 // pred_region
      %28 = dma.done [#allocation3], 256
    $region17: #{tpu_custom_call.1} parent=1 // pred_fallthru
      _
    %v29 = vld [vmem:[#allocation2] sm:$0xff]
    %v30 = vld [vmem:[#allocation2 + $0x8] sm:$0xff]
    %v31 = vld [vmem:[%s1] sm:$0x1]
    %v32 = vld [vmem:[%s2] sm:$0x1]
    %vm33 = vcmask 261120
    %v34 = vsel %vm33, %v29, 0.0
    %35 = vadd.xlane.f32.xlu0 %v34
    %v36 = vpop.xlane.xlu0 %35
    %v37 = vsel %vm33, %v30, 0.0
    %38 = vadd.xlane.f32.xlu0 %v37
    %v39 = vpop.xlane.xlu0 %38
    %v40 = vrcp.pop 32.0
    %v41 = vmul.f32 %v36, %v40
    %v42 = vmul.f32 %v39, %v40
    %v43 = vsub.f32 %v29, %v41
    %v44 = vsub.f32 %v30, %v42
    %v45 = vmul.f32 %v43, %v43
    %v46 = vmul.f32 %v44, %v44
    %v47 = vsel %vm33, %v45, 0.0
    %48 = vadd.xlane.f32.xlu0 %v47
    %v49 = vpop.xlane.xlu0 %48
    %v50 = vsel %vm33, %v46, 0.0
    %51 = vadd.xlane.f32.xlu0 %v50
    %v52 = vpop.xlane.xlu0 %51
    %v53 = vmul.f32 %v49, %v40
    %v54 = vmul.f32 %v52, %v40
    %v55 = vadd.f32 %v53, 1e-12
    %v56 = vadd.f32 %v54, 1e-12
    %v57 = vrsqrt.pop %v55
    %v58 = vrsqrt.pop %v56
    %v59 = vmul.f32 %v43, %v57
    %v60 = vmul.f32 %v44, %v58
    %v62 = vlaneseq
    %v63 = vshrl.u32 %v62, 7
    %v64 = vsub.s32 0, %v63
    %v65 = vrot.slane %v31, %v64
    %v67 = vmul.f32 %v59, %v65
    %v68 = vmul.f32 %v60, %v65
    %v70 = vlaneseq
    %v71 = vshrl.u32 %v70, 7
    %v72 = vsub.s32 0, %v71
    %v73 = vrot.slane %v32, %v72
    %v75 = vadd.f32 %v67, %v73
    %v76 = vadd.f32 %v68, %v73
    %77 = vst.msk [vmem:[#allocation5] sm:$0xff] %vm33, %v75
    %78 = vst.msk [vmem:[#allocation5 + $0x8] sm:$0xff] %vm33, %v76
    // Predicated region
    $region18: #{tpu_custom_call.1} parent=1 // pred_check
      _
    $region19: #{tpu_custom_call.1} parent=1 // pred_check_branch
      %80 = sbr.rel (0) target = $region21
    $region20: #{tpu_custom_call.1} parent=1 // pred_region
      %s82 = ssub.s32 256, 256
      %83 = vsyncadd [#allocation4], %s82
      %s84 = sshll.u32 [#allocation5], 4
      %s85 = int_to_ptr.vmem [resolvable:$true] %s84
      %90 = dma.vmem_to_hbm [thread:$0]  %s85, 256, %s3, [#allocation4], 128, 128, 8
    $region21: #{tpu_custom_call.1} parent=1 // pred_fallthru
      _
    // Predicated region
    $region22: #{tpu_custom_call.1} parent=1 // pred_check
      _
    $region23: #{tpu_custom_call.1} parent=1 // pred_check_branch
      %92 = sbr.rel (0) target = $region25
    $region24: #{tpu_custom_call.1} parent=1 // pred_region
      %93 = dma.done [#allocation4], 256
    $region25: #{tpu_custom_call.1} parent=1 // pred_fallthru
      _
    %94 = vsyncpa [#allocation3], 1
    %95 = vsyncpa [#allocation4], 1

</llo_original>
